<compile_context>
chip_gen: v7x
topology: tpu7x:2x2x1
jax: 0.10.0
libtpu: 0.0.40
codegen_flags: <defaults>
</compile_context>

<pallas_src>
import functools
import math

import jax
import jax.numpy as jnp
from jax import lax
from jax.experimental import pallas as pl
from jax.experimental.pallas import tpu as pltpu

# Hyperparameters (match the PyTorch module defaults).
ALPHA = 2.1
OMEGA = 14.0
EPSILON = 1.0
THETA = 0.5

_TARGET_BLOCK_BYTES = 2 * 1024 * 1024   # ~2 MiB per buffer -> <=12 MiB double-buffered
_MIN_SPLIT_BYTES = 1 * 1024 * 1024      # force grid >= 2 above this (v7x has 2 TCs)
_VMEM_LIMIT_BYTES = 32 * 1024 * 1024


# --------------------------------------------------------------------------- #
# Kernel-side math (f32, one (block_rows, width) vreg-resident block)
# --------------------------------------------------------------------------- #
def _loss_block(yp, yt, *, alpha, omega, epsilon, theta):
    """Elementwise Adaptive Wing loss on an f32 block.  3 EUP transcendentals
    (log, exp, log1p) + 1 approx reciprocal per element."""
    t = theta / epsilon                  # compile-time constant > 0
    log_t = math.log(t)
    t_inv = epsilon / theta              # 1 / t
    inv_eps = 1.0 / epsilon
    omega_over_eps = omega / epsilon

    e = alpha - yt                       # exponent (alpha - y_target), > 0
    diff = jnp.abs(yt - yp)
    ratio = diff * inv_eps
    is_case1 = diff < theta

    # Select the *argument* before the transcendental so both branches share a
    # single log / exp / log1p:
    #   case1 needs (diff/eps)**e, case2 needs (theta/eps)**e.
    safe_ratio = jnp.maximum(ratio, jnp.float32(1e-30))
    x = jnp.where(is_case1, jnp.log(safe_ratio), jnp.float32(log_t))
    p = jnp.exp(e * x)                   # ratio**e (case1) / (theta/eps)**e (case2)
    l = jnp.log1p(p)

    # A only matters on case2 lanes, where p == (theta/eps)**e exactly.
    # 1/(1+p) via approx EUP reciprocal + Newton refinement on the VPU (the
    # second step is belt-and-suspenders for the 1e-5 tolerance; both steps
    # ride in otherwise-idle VALU slots of this EUP-bound kernel).
    one_p = 1.0 + p
    r = pl.reciprocal(one_p, approx=True)
    r = r * (2.0 - one_p * r)
    r = r * (2.0 - one_p * r)
    A = omega_over_eps * e * (p * t_inv) * r      # (theta/eps)**(e-1) == p / t

    # case1: omega*log1p(ratio**e); exactly 0 at diff == 0 (0**e == 0, e > 0).
    case1 = jnp.where(ratio > 0.0, omega * l, 0.0)
    # case2: A*diff - C  ==  A*(diff - theta) + omega*log1p((theta/eps)**e).
    case2 = A * (diff - theta) + omega * l
    return jnp.where(is_case1, case1, case2)


def _awing_kernel(yp_ref, yt_ref, out_ref, *, alpha, omega, epsilon, theta):
    yp = yp_ref[...].astype(jnp.float32)
    yt = yt_ref[...].astype(jnp.float32)
    loss = _loss_block(yp, yt, alpha=alpha, omega=omega,
                       epsilon=epsilon, theta=theta)
    out_ref[...] = loss.astype(out_ref.dtype)


def _awing_sum_kernel(yp_ref, yt_ref, out_ref, *, alpha, omega, epsilon, theta,
                      block_rows, valid_rows):
    """Per-grid-step partial sum; the tiny (num_blocks, 8, 128) output replaces
    the full N-element store (reduction finished in plain JAX)."""
    yp = yp_ref[...].astype(jnp.float32)
    yt = yt_ref[...].astype(jnp.float32)
    loss = _loss_block(yp, yt, alpha=alpha, omega=omega,
                       epsilon=epsilon, theta=theta)
    # Mask rows of a (possibly) partial last block; OOB lanes hold garbage.
    row0 = pl.program_id(0) * block_rows
    rid = row0 + lax.broadcasted_iota(jnp.int32, loss.shape, 0)
    loss = jnp.where(rid < valid_rows, loss, 0.0)
    s = jnp.sum(loss)
    out_ref[...] = jnp.broadcast_to(s, out_ref.shape).astype(out_ref.dtype)


# --------------------------------------------------------------------------- #
# Wrapper-side tiling helpers
# --------------------------------------------------------------------------- #
def _sublane_align(itemsize):
    # f32: (8,128) vreg; bf16 packs (16,128); int8/fp8 pack (32,128).
    return {4: 8, 2: 16, 1: 32}.get(int(itemsize), 8)


def _choose_width(n):
    """Lane-dense last dim (large multiple of 128) dividing n if possible."""
    for w in (2048, 1024, 512, 256, 128):
        if n % w == 0:
            return w
    return 128  # ragged: kernel covers the 128-divisible prefix, tail in JAX


def _pick_block_rows(rows, width, itemsize):
    align = _sublane_align(itemsize)
    max_block_rows = max(
        align, (_TARGET_BLOCK_BYTES // (width * itemsize)) // align * align)
    if rows > max_block_rows:
        return max_block_rows
    array_bytes = rows * width * itemsize
    if array_bytes > _MIN_SPLIT_BYTES and rows >= 2 * align:
        # v7x has 2 TensorCores and "parallel" grid axes shard across them:
        # split medium inputs into (at least) 2 blocks.  No-op on v5e/v6e.
        half = pl.cdiv(rows, 2)
        return pl.cdiv(half, align) * align
    return rows


def _run_elementwise(yp_flat, yt_flat, width, out_dtype, kw):
    n = yp_flat.size
    rows = n // width
    itemsize = jnp.dtype(out_dtype).itemsize
    block_rows = _pick_block_rows(rows, width, itemsize)
    block = (block_rows, width)
    grid = (pl.cdiv(rows, block_rows),)
    kernel = functools.partial(_awing_kernel, **kw)
    out2 = pl.pallas_call(
        kernel,
        out_shape=jax.ShapeDtypeStruct((rows, width), out_dtype),
        grid_spec=pltpu.PrefetchScalarGridSpec(
            num_scalar_prefetch=0,
            grid=grid,
            in_specs=[pl.BlockSpec(block, lambda i: (i, 0)),
                      pl.BlockSpec(block, lambda i: (i, 0))],
            out_specs=pl.BlockSpec(block, lambda i: (i, 0)),
        ),
        compiler_params=pltpu.CompilerParams(
            dimension_semantics=("parallel",),
            vmem_limit_bytes=_VMEM_LIMIT_BYTES),
    )(yp_flat.reshape(rows, width), yt_flat.reshape(rows, width))
    return out2.reshape(-1)


def _run_sum(yp_flat, yt_flat, width, in_dtype, kw):
    n = yp_flat.size
    rows = n // width
    itemsize = jnp.dtype(in_dtype).itemsize
    block_rows = _pick_block_rows(rows, width, itemsize)
    block = (block_rows, width)
    num_blocks = pl.cdiv(rows, block_rows)
    kernel = functools.partial(_awing_sum_kernel, block_rows=block_rows,
                               valid_rows=rows, **kw)
    partial = pl.pallas_call(
        kernel,
        out_shape=jax.ShapeDtypeStruct((num_blocks, 8, 128), jnp.float32),
        grid_spec=pltpu.PrefetchScalarGridSpec(
            num_scalar_prefetch=0,
            grid=(num_blocks,),
            in_specs=[pl.BlockSpec(block, lambda i: (i, 0)),
                      pl.BlockSpec(block, lambda i: (i, 0))],
            out_specs=pl.BlockSpec((1, 8, 128), lambda i: (i, 0, 0)),
        ),
        compiler_params=pltpu.CompilerParams(
            dimension_semantics=("parallel",),
            vmem_limit_bytes=_VMEM_LIMIT_BYTES),
    )(yp_flat.reshape(rows, width), yt_flat.reshape(rows, width))
    return jnp.sum(partial[:, 0, 0])


# --------------------------------------------------------------------------- #
# Public entry point
# --------------------------------------------------------------------------- #
def adaptive_wing_loss(y_pred, y_target, *, alpha=ALPHA, omega=OMEGA,
                       epsilon=EPSILON, theta=THETA, reduction="none"):
    """Adaptive Wing loss.

    reduction="none" (default): elementwise loss matrix, same shape/dtype as
    y_pred (matches the PyTorch module's forward).
    reduction="sum"/"mean": fused in-kernel partial sums (f32 scalar result);
    avoids storing / re-reading the N-element loss matrix.
    """
    assert y_pred.shape == y_target.shape
    assert reduction in ("none", "sum", "mean")
    orig_shape = y_pred.shape
    out_dtype = y_pred.dtype
    kw = dict(alpha=float(alpha), omega=float(omega),
              epsilon=float(epsilon), theta=float(theta))

    yp = y_pred.reshape(-1)
    yt = y_target.reshape(-1)
    n = yp.size

    width = _choose_width(n)
    n_main = (n // width) * width        # 128-divisible prefix handled by kernel

    if reduction == "none":
        if n_main == 0:
            # Tiny (<128-element) input: pure-JAX fallback.
            return _reference(yp, yt, **kw).astype(out_dtype).reshape(orig_shape)
        out_main = _run_elementwise(yp[:n_main], yt[:n_main], width, out_dtype, kw)
        if n_main == n:
            return out_main.reshape(orig_shape)
        # Ragged tail (< width elements): tiny pure-JAX expression, no pad/slice
        # extra passes over the full arrays.
        tail = _reference(yp[n_main:], yt[n_main:], **kw).astype(out_dtype)
        return jnp.concatenate([out_main, tail]).reshape(orig_shape)

    # reduction == "sum" / "mean"
    total = jnp.float32(0.0)
    if n_main:
        total = total + _run_sum(yp[:n_main], yt[:n_main], width, out_dtype, kw)
    if n_main < n:
        total = total + jnp.sum(_reference(yp[n_main:], yt[n_main:], **kw))
    if reduction == "mean":
        total = total / jnp.float32(n)
    return total


# --------------------------------------------------------------------------- #
# Pure-JAX reference (mirrors the PyTorch forward); also used for ragged tails.
# --------------------------------------------------------------------------- #
def _reference(y_pred, y_target, alpha=ALPHA, omega=OMEGA,
               epsilon=EPSILON, theta=THETA):
    yp = y_pred.astype(jnp.float32)
    yt = y_target.astype(jnp.float32)
    A = (omega * (1.0 / (1.0 + (theta / epsilon) ** (alpha - yt)))
         * (alpha - yt) * (theta / epsilon) ** (alpha - yt - 1.0)
         * (1.0 / epsilon))
    C = theta * A - omega * jnp.log(1.0 + (theta / epsilon) ** (alpha - yt))
    diff = jnp.abs(yt - yp)
    case1 = omega * jnp.log(1.0 + jnp.abs(diff / epsilon) ** (alpha - yt))
    case2 = A * diff - C
    return jnp.where(diff < theta, case1, case2)


if __name__ == "__main__":
    key = jax.random.PRNGKey(0)
    k1, k2, k3, k4 = jax.random.split(key, 4)

    # Heatmap-like inputs: NCHW, small shape (128-divisible fast path).
    shape = (2, 4, 16, 16)
    y_target = jax.random.uniform(k1, shape, dtype=jnp.float32)        # in [0, 1)
    y_pred = y_target + 0.4 * jax.random.normal(k2, shape, jnp.float32)

    loss_mat = jax.block_until_ready(adaptive_wing_loss(y_pred, y_target))
    ref = _reference(y_pred, y_target)
    assert loss_mat.shape == shape
    assert loss_mat.dtype == y_pred.dtype
    assert jnp.allclose(loss_mat, ref, rtol=1e-5, atol=1e-5), (
        float(jnp.max(jnp.abs(loss_mat - ref))))

    # Fused-reduction path (optional; forward semantics unchanged by default).
    loss_mean = jax.block_until_ready(
        adaptive_wing_loss(y_pred, y_target, reduction="mean"))
    ref_mean = jnp.mean(ref)
    assert jnp.allclose(loss_mean, ref_mean, rtol=1e-5, atol=1e-5), (
        float(jnp.abs(loss_mean - ref_mean)))

    # Ragged (non-128-aligned) shape exercises the prefix-kernel + JAX-tail path.
    shape2 = (3, 5, 7, 11)
    yt2 = jax.random.uniform(k3, shape2, dtype=jnp.float32)
    yp2 = yt2 + 0.4 * jax.random.normal(k4, shape2, jnp.float32)
    loss2 = jax.block_until_ready(adaptive_wing_loss(yp2, yt2))
    ref2 = _reference(yp2, yt2)
    assert loss2.shape == shape2
    assert jnp.allclose(loss2, ref2, rtol=1e-5, atol=1e-5), (
        float(jnp.max(jnp.abs(loss2 - ref2))))

    loss2_sum = jax.block_until_ready(adaptive_wing_loss(yp2, yt2, reduction="sum"))
    assert jnp.allclose(loss2_sum, jnp.sum(ref2), rtol=1e-5, atol=1e-4), (
        float(jnp.abs(loss2_sum - jnp.sum(ref2))))

    print("KERNEL_OK")
</pallas_src>

<mosaic_0001>
module attributes {stable_mosaic.version = 11 : i64} {
  func.func @_awing_kernel(%arg0: i32, %arg1: memref<1x2048xf32, #tpu.memory_space<vmem>>, %arg2: memref<1x2048xf32, #tpu.memory_space<vmem>>, %arg3: memref<1x2048xf32, #tpu.memory_space<vmem>>) attributes {dimension_semantics = [#tpu.dimension_semantics<parallel>], iteration_bounds = array<i64: 1>, scalar_prefetch = 0 : i64, scratch_operands = 0 : i64, tpu.core_type = #tpu.core_type<tc>, window_params = [{transform_indices = @transform_0, window_bounds = array<i64: 1, 2048>}, {transform_indices = @transform_1, window_bounds = array<i64: 1, 2048>}, {transform_indices = @transform_2, window_bounds = array<i64: 1, 2048>}]} {
    %c0 = arith.constant 0 : index
    %c0_0 = arith.constant 0 : index
    %0 = vector.load %arg1[%c0, %c0_0] : memref<1x2048xf32, #tpu.memory_space<vmem>>, vector<1x2048xf32>
    %c0_1 = arith.constant 0 : index
    %c0_2 = arith.constant 0 : index
    %1 = vector.load %arg2[%c0_1, %c0_2] : memref<1x2048xf32, #tpu.memory_space<vmem>>, vector<1x2048xf32>
    %cst = arith.constant 2.100000e+00 : f32
    %2 = vector.broadcast %cst : f32 to vector<1x2048xf32>
    %3 = arith.subf %2, %1 : vector<1x2048xf32>
    %4 = arith.subf %1, %0 : vector<1x2048xf32>
    %5 = math.absf %4 : vector<1x2048xf32>
    %cst_3 = arith.constant 1.000000e+00 : f32
    %6 = vector.broadcast %cst_3 : f32 to vector<1x2048xf32>
    %7 = arith.mulf %5, %6 : vector<1x2048xf32>
    %cst_4 = arith.constant 5.000000e-01 : f32
    %8 = vector.broadcast %cst_4 : f32 to vector<1x2048xf32>
    %9 = arith.cmpf olt, %5, %8 : vector<1x2048xf32>
    %cst_5 = arith.constant 1.000000e-30 : f32
    %10 = vector.broadcast %cst_5 : f32 to vector<1x2048xf32>
    %11 = arith.maximumf %7, %10 : vector<1x2048xf32>
    %12 = math.log %11 : vector<1x2048xf32>
    %cst_6 = arith.constant -0.693147182 : f32
    %13 = vector.broadcast %cst_6 : f32 to vector<1x2048xf32>
    %14 = arith.select %9, %12, %13 : vector<1x2048xi1>, vector<1x2048xf32>
    %15 = arith.mulf %3, %14 : vector<1x2048xf32>
    %16 = math.exp %15 : vector<1x2048xf32>
    %17 = math.log1p %16 : vector<1x2048xf32>
    %cst_7 = arith.constant 1.000000e+00 : f32
    %18 = vector.broadcast %cst_7 : f32 to vector<1x2048xf32>
    %19 = arith.addf %18, %16 : vector<1x2048xf32>
    %20 = tpu.reciprocal %19 {approx = true} : vector<1x2048xf32> -> vector<1x2048xf32>
    %21 = arith.mulf %19, %20 : vector<1x2048xf32>
    %cst_8 = arith.constant 2.000000e+00 : f32
    %22 = vector.broadcast %cst_8 : f32 to vector<1x2048xf32>
    %23 = arith.subf %22, %21 : vector<1x2048xf32>
    %24 = arith.mulf %20, %23 : vector<1x2048xf32>
    %25 = arith.mulf %19, %24 : vector<1x2048xf32>
    %cst_9 = arith.constant 2.000000e+00 : f32
    %26 = vector.broadcast %cst_9 : f32 to vector<1x2048xf32>
    %27 = arith.subf %26, %25 : vector<1x2048xf32>
    %28 = arith.mulf %24, %27 : vector<1x2048xf32>
    %cst_10 = arith.constant 1.400000e+01 : f32
    %29 = vector.broadcast %cst_10 : f32 to vector<1x2048xf32>
    %30 = arith.mulf %29, %3 : vector<1x2048xf32>
    %cst_11 = arith.constant 2.000000e+00 : f32
    %31 = vector.broadcast %cst_11 : f32 to vector<1x2048xf32>
    %32 = arith.mulf %16, %31 : vector<1x2048xf32>
    %33 = arith.mulf %30, %32 : vector<1x2048xf32>
    %34 = arith.mulf %33, %28 : vector<1x2048xf32>
    %cst_12 = arith.constant 0.000000e+00 : f32
    %35 = vector.broadcast %cst_12 : f32 to vector<1x2048xf32>
    %36 = arith.cmpf ogt, %7, %35 : vector<1x2048xf32>
    %cst_13 = arith.constant 1.400000e+01 : f32
    %37 = vector.broadcast %cst_13 : f32 to vector<1x2048xf32>
    %38 = arith.mulf %37, %17 : vector<1x2048xf32>
    %cst_14 = arith.constant 0.000000e+00 : f32
    %39 = vector.broadcast %cst_14 : f32 to vector<1x2048xf32>
    %40 = arith.select %36, %38, %39 : vector<1x2048xi1>, vector<1x2048xf32>
    %cst_15 = arith.constant 5.000000e-01 : f32
    %41 = vector.broadcast %cst_15 : f32 to vector<1x2048xf32>
    %42 = arith.subf %5, %41 : vector<1x2048xf32>
    %43 = arith.mulf %34, %42 : vector<1x2048xf32>
    %cst_16 = arith.constant 1.400000e+01 : f32
    %44 = vector.broadcast %cst_16 : f32 to vector<1x2048xf32>
    %45 = arith.mulf %44, %17 : vector<1x2048xf32>
    %46 = arith.addf %43, %45 : vector<1x2048xf32>
    %47 = arith.select %9, %40, %46 : vector<1x2048xi1>, vector<1x2048xf32>
    %c0_17 = arith.constant 0 : index
    %c0_18 = arith.constant 0 : index
    %48 = vector.load %arg3[%c0_17, %c0_18] : memref<1x2048xf32, #tpu.memory_space<vmem>>, vector<1x2048xf32>
    tpu.vector_store %arg3[%c0_17, %c0_18], %47 {strides = array<i32>} : memref<1x2048xf32, #tpu.memory_space<vmem>>, vector<1x2048xf32>,
    return
  }
  func.func @transform_0(%arg0: i32) -> (i32, i32) {
    %c0_i32 = arith.constant 0 : i32
    %c0_i32_0 = arith.constant 0 : i32
    return %arg0, %c0_i32 : i32, i32
  }
  func.func @transform_1(%arg0: i32) -> (i32, i32) {
    %c0_i32 = arith.constant 0 : i32
    %c0_i32_0 = arith.constant 0 : i32
    return %arg0, %c0_i32 : i32, i32
  }
  func.func @transform_2(%arg0: i32) -> (i32, i32) {
    %c0_i32 = arith.constant 0 : i32
    %c0_i32_0 = arith.constant 0 : i32
    return %arg0, %c0_i32 : i32, i32
  }
}

</mosaic_0001>

<llo_original>
// kernel: tpu_custom_call.1
$region0: #{tpu_custom_call.1}
  #allocation0 [shape = 'u32[]', space=smem, size = 0x4, offset = 0x4, fixed_abs, tag = 'smem constant byte address 0x4 - core index']
  #allocation1 [shape = 'u32[144,128]{1,0:T(1,128)}', space=vmem, size = 0x12000, scoped, tag = 'internal scratch']
  %s0 = inlined_call_operand.hbm [shape: f32[1,2048], index: 0, kind: input, shape index: {}]
  %s1 = inlined_call_operand.hbm [shape: f32[1,2048], index: 1, kind: input, shape index: {}]
  %s2 = inlined_call_operand.hbm [shape: f32[1,2048], index: 2, kind: output, shape index: {}]
  %s3 = sld [smem:[#allocation0]]
  $region26: #{tpu_custom_call.1} parent=0
    _
  %s5 = ssub.s32 1, %s3
  %s6 = scalar_select 0, %s5, %s3
  $region1: #{tpu_custom_call.1} parent=0
    #allocation2 [shape = 'u8[8192]{0}', space=vmem, size = 0x2000, scoped, tag = 'input window, operand 0, single buffered']
    #allocation3 [shape = 's32[1]{0}', space=sflag, size = 0x4, scoped, tag = 'scoped memory for tpu_custom_call.1']
    #allocation4 [shape = 's32[1]{0}', space=sflag, size = 0x4, scoped, tag = 'scoped memory for tpu_custom_call.1']
    #allocation5 [shape = 'u8[8192]{0}', space=vmem, size = 0x2000, scoped, tag = 'input window, operand 1, single buffered']
    #allocation6 [shape = 's32[1]{0}', space=sflag, size = 0x4, scoped, tag = 'scoped memory for tpu_custom_call.1']
    #allocation7 [shape = 'u8[8192]{0}', space=vmem, size = 0x2000, scoped, tag = 'output window, operand 0, single buffered']
    %7 = vsyncpa [#allocation3], 0
    %8 = vsyncpa [#allocation6], 0
    %9 = vsyncpa [#allocation4], 0
    // Predicated region
    $region2: #{tpu_custom_call.1} parent=1 // pred_check
      _
    $region3: #{tpu_custom_call.1} parent=1 // pred_check_branch
      %11 = sbr.rel (0) target = $region5
    $region4: #{tpu_custom_call.1} parent=1 // pred_region
      %s13 = ssub.s32 256, 256
      %14 = vsyncadd [#allocation3], %s13
      %s16 = sshll.u32 [#allocation2], 4
      %s17 = int_to_ptr.vmem [resolvable:$true] %s16
      %19 = dma.hbm_to_vmem [thread:$0]  %s0, 256, %s17, [#allocation3]
    $region5: #{tpu_custom_call.1} parent=1 // pred_fallthru
      _
    // Predicated region
    $region6: #{tpu_custom_call.1} parent=1 // pred_check
      _
    $region7: #{tpu_custom_call.1} parent=1 // pred_check_branch
      %21 = sbr.rel (0) target = $region9
    $region8: #{tpu_custom_call.1} parent=1 // pred_region
      %s23 = ssub.s32 256, 256
      %24 = vsyncadd [#allocation6], %s23
      %s26 = sshll.u32 [#allocation5], 4
      %s27 = int_to_ptr.vmem [resolvable:$true] %s26
      %29 = dma.hbm_to_vmem [thread:$0]  %s1, 256, %s27, [#allocation6]
    $region9: #{tpu_custom_call.1} parent=1 // pred_fallthru
      _
    // Predicated region
    $region10: #{tpu_custom_call.1} parent=1 // pred_check
      _
    $region11: #{tpu_custom_call.1} parent=1 // pred_check_branch
      %31 = sbr.rel (0) target = $region13
    $region12: #{tpu_custom_call.1} parent=1 // pred_region
      %32 = dma.done [#allocation3], 256
    $region13: #{tpu_custom_call.1} parent=1 // pred_fallthru
      _
    // Predicated region
    $region14: #{tpu_custom_call.1} parent=1 // pred_check
      _
    $region15: #{tpu_custom_call.1} parent=1 // pred_check_branch
      %34 = sbr.rel (0) target = $region17
    $region16: #{tpu_custom_call.1} parent=1 // pred_region
      %35 = dma.done [#allocation6], 256
    $region17: #{tpu_custom_call.1} parent=1 // pred_fallthru
      _
    %v36 = vld [vmem:[#allocation2] sm:$0xff]
    %v37 = vld [vmem:[#allocation2 + $0x8] sm:$0xff]
    %v38 = vld [vmem:[#allocation5] sm:$0xff]
    %v39 = vld [vmem:[#allocation5 + $0x8] sm:$0xff]
    %v40 = vsub.f32 2.1, %v38
    %v41 = vsub.f32 2.1, %v39
    %v42 = vsub.f32 %v38, %v36
    %v43 = vsub.f32 %v39, %v37
    %v44 = vand.u32 2147483647, %v42
    %v45 = vand.u32 2147483647, %v43
    %vm46 = vcmp.lt.f32.partialorder %v44, 0.5
    %vm47 = vcmp.lt.f32.partialorder %v45, 0.5
    %v48 = vmax.f32 %v44, 1e-30
    %v49 = vmax.f32 %v45, 1e-30
    %v50 = vlog2.pop %v48
    %v51 = vmul.f32 %v50, 0.6931472
    %v52 = vlog2.pop %v49
    %v53 = vmul.f32 %v52, 0.6931472
    %v54 = vsel %vm46, %v51, -0.6931472
    %v55 = vsel %vm47, %v53, -0.6931472
    %v56 = vmul.f32 %v40, %v54
    %v57 = vmul.f32 %v41, %v55
    %v58 = vmul.f32 %v56, 1.442695
    %v59 = vpow.pop %v58
    %v60 = vmul.f32 %v57, 1.442695
    %v61 = vpow.pop %v60
    %v62 = vadd.f32 %v59, 1.0
    %v63 = vlog2.pop %v62
    %v64 = vmul.f32 %v63, 0.6931472
    %v65 = vmul.f32 -0.5, %v59
    %v66 = vadd.f32 %v65, 1.0
    %v67 = vmul.f32 %v66, %v59
    %v68 = vand.u32 2147483647, %v59
    %vm69 = vcmp.lt.f32.partialorder %v68, 0.0004427343
    %v70 = vsel %vm69, %v67, %v64
    %v71 = vadd.f32 %v61, 1.0
    %v72 = vlog2.pop %v71
    %v73 = vmul.f32 %v72, 0.6931472
    %v74 = vmul.f32 -0.5, %v61
    %v75 = vadd.f32 %v74, 1.0
    %v76 = vmul.f32 %v75, %v61
    %v77 = vand.u32 2147483647, %v61
    %vm78 = vcmp.lt.f32.partialorder %v77, 0.0004427343
    %v79 = vsel %vm78, %v76, %v73
    %v80 = vadd.f32 %v59, 1.0
    %v81 = vadd.f32 %v61, 1.0
    %v82 = vrcp.pop %v80
    %v83 = vrcp.pop %v81
    %v84 = vmul.f32 %v80, %v82
    %v85 = vmul.f32 %v81, %v83
    %v86 = vsub.f32 2.0, %v84
    %v87 = vsub.f32 2.0, %v85
    %v88 = vmul.f32 %v82, %v86
    %v89 = vmul.f32 %v83, %v87
    %v90 = vmul.f32 %v80, %v88
    %v91 = vmul.f32 %v81, %v89
    %v92 = vsub.f32 2.0, %v90
    %v93 = vsub.f32 2.0, %v91
    %v94 = vmul.f32 %v88, %v92
    %v95 = vmul.f32 %v89, %v93
    %v96 = vmul.f32 %v40, 14.0
    %v97 = vmul.f32 %v41, 14.0
    %v98 = vmul.f32 %v59, 2.0
    %v99 = vmul.f32 %v61, 2.0
    %v100 = vmul.f32 %v96, %v98
    %v101 = vmul.f32 %v97, %v99
    %v102 = vmul.f32 %v100, %v94
    %v103 = vmul.f32 %v101, %v95
    %vm104 = vcmp.gt.f32.partialorder %v44, 0.0
    %vm105 = vcmp.gt.f32.partialorder %v45, 0.0
    %v106 = vmul.f32 %v70, 14.0
    %v107 = vmul.f32 %v79, 14.0
    %v108 = vsel %vm104, %v106, 0.0
    %v109 = vsel %vm105, %v107, 0.0
    %v110 = vsub.f32 %v44, 0.5
    %v111 = vsub.f32 %v45, 0.5
    %v112 = vmul.f32 %v102, %v110
    %v113 = vmul.f32 %v103, %v111
    %v114 = vadd.f32 %v112, %v106
    %v115 = vadd.f32 %v113, %v107
    %v116 = vsel %vm46, %v108, %v114
    %v117 = vsel %vm47, %v109, %v115
    %118 = vst [vmem:[#allocation7] sm:$0xff] %v116
    %119 = vst [vmem:[#allocation7 + $0x8] sm:$0xff] %v117
    // Predicated region
    $region18: #{tpu_custom_call.1} parent=1 // pred_check
      _
    $region19: #{tpu_custom_call.1} parent=1 // pred_check_branch
      %121 = sbr.rel (0) target = $region21
    $region20: #{tpu_custom_call.1} parent=1 // pred_region
      %s123 = ssub.s32 256, 256
      %124 = vsyncadd [#allocation4], %s123
      %s126 = sshll.u32 [#allocation7], 4
      %s127 = int_to_ptr.vmem [resolvable:$true] %s126
      %129 = dma.vmem_to_hbm [thread:$0]  %s127, 256, %s2, [#allocation4]
    $region21: #{tpu_custom_call.1} parent=1 // pred_fallthru
      _
    // Predicated region
    $region22: #{tpu_custom_call.1} parent=1 // pred_check
      _
    $region23: #{tpu_custom_call.1} parent=1 // pred_check_branch
      %131 = sbr.rel (0) target = $region25
    $region24: #{tpu_custom_call.1} parent=1 // pred_region
      %132 = dma.done [#allocation4], 256
    $region25: #{tpu_custom_call.1} parent=1 // pred_fallthru
      _
    %133 = vsyncpa [#allocation3], 1
    %134 = vsyncpa [#allocation6], 1
    %135 = vsyncpa [#allocation4], 1

</llo_original>
